<compile_context>
chip_gen: v6e
topology: v6e:2x2x1
jax: 0.10.0
libtpu: 0.0.40
codegen_flags: <defaults>
</compile_context>

<pallas_src>
import jax
import jax.numpy as jnp
from jax import lax
from jax.experimental import pallas as pl
from jax.experimental.pallas import tpu as pltpu


# ----------------------------------------------------------------------------
# Pallas kernel: fused fc (Linear) + L2-normalize (Normalize(power=2), dim=1)
# ----------------------------------------------------------------------------
def ic_head_kernel(feat_ref, w_ref, b_ref, logits_ref, l2_ref):
    # feat: (TB, D), w: (D, L) -- pre-transposed at init time, b: (1, L) f32.
    # MXU matmul with f32 accumulation; bias add in f32.
    logits = jnp.dot(feat_ref[...], w_ref[...],
                     preferred_element_type=jnp.float32) + b_ref[...]
    logits_ref[...] = logits.astype(logits_ref.dtype)

    # Normalize(power=2): out = x / sqrt(sum(x^2, dim=1)).
    # rsqrt issues on the EUP slot; the multiply replaces a VALU divide.
    # No eps: a genuinely all-zero row divides by zero, matching PyTorch.
    sumsq = jnp.sum(logits * logits, axis=1, keepdims=True)
    l2_ref[...] = (logits * lax.rsqrt(sumsq)).astype(l2_ref.dtype)


# ----------------------------------------------------------------------------
# One-time parameter preparation (hoisted out of the per-call wrapper)
# ----------------------------------------------------------------------------
def prepare_ic_head_params(fc_w, fc_b, *, mxu_dtype=None):
    """fc_w: (low_dim, out_dim) PyTorch nn.Linear layout; fc_b: (low_dim,).

    Transposes the weight to (out_dim, low_dim) so the kernel feeds the MXU
    directly (no in-kernel XLU transpose), and optionally casts it to the MXU
    feed dtype.  Done once, not per forward call.
    """
    wt = jnp.asarray(fc_w).T                      # (out_dim, low_dim)
    if mxu_dtype is not None:
        wt = wt.astype(mxu_dtype)
    b2 = jnp.asarray(fc_b).reshape(1, -1).astype(jnp.float32)
    return {"fc_wt": wt, "fc_b2": b2}


# ----------------------------------------------------------------------------
# Fused head wrapper
# ----------------------------------------------------------------------------
def ic_head(feat, fc_wt, fc_b2, *, tb=1024, mxu_dtype=None):
    """Fused fc + L2-normalize head.

    feat:  (B, out_dim) f32
    fc_wt: (out_dim, low_dim)  -- already transposed (prepare_ic_head_params)
    fc_b2: (1, low_dim) f32
    tb:    batch tile (multiple of 8; 1024-2048 sweet spot for this HBM-bound head)
    mxu_dtype: optionally jnp.bfloat16 to halve feat/weight DMA bytes and feed
               the bf16 MXU (normalization and outputs stay f32).
    """
    B, D = feat.shape
    L = fc_wt.shape[1]

    if mxu_dtype is not None:
        feat = feat.astype(mxu_dtype)
        fc_wt = fc_wt.astype(mxu_dtype)          # no-op if prepared in mxu_dtype

    # Batch tile: multiple of 8 (f32 sublane), no bigger than the padded batch.
    Bp8 = ((B + 7) // 8) * 8
    TB = max(8, (min(tb, Bp8) // 8) * 8)
    # Keep >= 2 grid steps when the batch permits so v7x's 2 TensorCores can
    # split the "parallel" batch axis.  Harmless on v5e/v6e (1 TC).
    if Bp8 >= 16 and TB >= Bp8:
        TB = max(8, ((Bp8 // 2) // 8) * 8)
    Bp = pl.cdiv(B, TB) * TB

    # The only wrapper-side copy of feat: a single pad along batch, only when
    # needed.  No column padding (full-array-dim exception in the BlockSpecs).
    if Bp != B:
        feat = jnp.pad(feat, ((0, Bp - B), (0, 0)))

    grid = (Bp // TB,)
    in_bytes = feat.dtype.itemsize

    out_shapes = (
        jax.ShapeDtypeStruct((Bp, L), jnp.float32),  # out_logits
        jax.ShapeDtypeStruct((Bp, L), jnp.float32),  # out_l2norm
    )

    # VMEM budget: double-buffered feat tile + (weight, bias) resident x2 bufs
    # + 2 output tiles x2 bufs, with headroom; clamp to v7x's 64 MiB physical.
    needed = 2 * (TB * D * in_bytes + D * L * in_bytes + L * 4 + 2 * TB * L * 4)
    vmem_limit = min(max(2 * needed + (8 << 20), 32 << 20), 64 << 20)

    cost = pl.CostEstimate(
        flops=2 * Bp * D * L,
        transcendentals=Bp,                       # one rsqrt per row
        bytes_accessed=in_bytes * (Bp * D + D * L) + 4 * L + 2 * 4 * Bp * L,
    )

    logits_p, l2_p = pl.pallas_call(
        ic_head_kernel,
        out_shape=out_shapes,
        grid=grid,
        in_specs=[
            pl.BlockSpec((TB, D), lambda i: (i, 0)),   # feat tile (streamed)
            pl.BlockSpec((D, L), lambda i: (0, 0)),    # weight (resident)
            pl.BlockSpec((1, L), lambda i: (0, 0)),    # bias   (resident)
        ],
        out_specs=(
            pl.BlockSpec((TB, L), lambda i: (i, 0)),
            pl.BlockSpec((TB, L), lambda i: (i, 0)),
        ),
        compiler_params=pltpu.CompilerParams(
            dimension_semantics=("parallel",),
            vmem_limit_bytes=vmem_limit,
        ),
        cost_estimate=cost,
    )(feat, fc_wt, fc_b2)

    if Bp != B:
        logits_p = logits_p[:B]
        l2_p = l2_p[:B]
    return logits_p, l2_p


# ----------------------------------------------------------------------------
# Deterministic stand-in encoder (plain-JAX glue): conv3x3 -> ReLU -> GAP
# ----------------------------------------------------------------------------
def encoder_forward(x, conv_w):
    """x: (B, C, H, W) NCHW; conv_w: (out_dim, C, 3, 3). Returns (B, out_dim)."""
    y = lax.conv_general_dilated(
        x, conv_w,
        window_strides=(1, 1),
        padding=((1, 1), (1, 1)),
        dimension_numbers=("NCHW", "OIHW", "NCHW"),
    )
    y = jnp.maximum(y, 0.0)
    return jnp.mean(y, axis=(2, 3))            # global average pool -> (B, out_dim)


# ----------------------------------------------------------------------------
# ICResNet forward
# ----------------------------------------------------------------------------
def ic_resnet_forward(x, params, *, mxu_dtype=None):
    feat = encoder_forward(x, params["conv_w"])           # encoder(x)
    out_logits, out_l2norm = ic_head(feat, params["fc_wt"], params["fc_b2"],
                                     mxu_dtype=mxu_dtype)
    return out_logits, out_l2norm


if __name__ == "__main__":
    # Small shapes consistent with the module's forward:
    B, C, H, W = 2, 4, 16, 16
    OUT_DIM = 64        # encoder.out_dim
    LOW_DIM = 32        # low_dim

    key = jax.random.PRNGKey(0)
    k_x, k_conv, k_fcw, k_fcb = jax.random.split(key, 4)

    x = jax.random.normal(k_x, (B, C, H, W), dtype=jnp.float32)
    conv_w = 0.1 * jax.random.normal(k_conv, (OUT_DIM, C, 3, 3), dtype=jnp.float32)
    fc_w = 0.1 * jax.random.normal(k_fcw, (LOW_DIM, OUT_DIM), dtype=jnp.float32)
    fc_b = 0.01 * jax.random.normal(k_fcb, (LOW_DIM,), dtype=jnp.float32)

    # One-time parameter prep (transpose hoisted out of the forward pass).
    params = {"conv_w": conv_w, **prepare_ic_head_params(fc_w, fc_b)}

    # --- f32 path: exact(ish) check against a pure-JAX reference -------------
    out_logits, out_l2norm = ic_resnet_forward(x, params)
    jax.block_until_ready((out_logits, out_l2norm))

    feat_ref = encoder_forward(x, conv_w)
    logits_ref = feat_ref @ fc_w.T + fc_b
    norm_ref = jnp.power(jnp.sum(jnp.power(logits_ref, 2), axis=1, keepdims=True), 0.5)
    l2_ref = logits_ref / norm_ref

    assert out_logits.shape == (B, LOW_DIM) and out_l2norm.shape == (B, LOW_DIM)
    assert jnp.allclose(out_logits, logits_ref, atol=1e-5, rtol=1e-5)
    assert jnp.allclose(out_l2norm, l2_ref, atol=1e-5, rtol=1e-5)

    # --- bf16 MXU-feed path (recommended on v6e/v7x): loose tolerance --------
    params_bf16 = {"conv_w": conv_w,
                   **prepare_ic_head_params(fc_w, fc_b, mxu_dtype=jnp.bfloat16)}
    lg_bf, l2_bf = ic_resnet_forward(x, params_bf16, mxu_dtype=jnp.bfloat16)
    jax.block_until_ready((lg_bf, l2_bf))
    assert jnp.allclose(lg_bf, logits_ref, atol=5e-2, rtol=5e-2)
    assert jnp.allclose(l2_bf, l2_ref, atol=5e-2, rtol=5e-2)

    print("KERNEL_OK")
</pallas_src>

<mosaic_0001>
module attributes {stable_mosaic.version = 11 : i64} {
  func.func @ic_head_kernel(%arg0: i32, %arg1: memref<8x64xf32, #tpu.memory_space<vmem>>, %arg2: memref<64x32xf32, #tpu.memory_space<vmem>>, %arg3: memref<1x32xf32, #tpu.memory_space<vmem>>, %arg4: memref<8x32xf32, #tpu.memory_space<vmem>>, %arg5: memref<8x32xf32, #tpu.memory_space<vmem>>) attributes {dimension_semantics = [#tpu.dimension_semantics<parallel>], iteration_bounds = array<i64: 1>, scalar_prefetch = 0 : i64, scratch_operands = 0 : i64, tpu.core_type = #tpu.core_type<tc>, window_params = [{transform_indices = @transform_0, window_bounds = array<i64: 8, 64>}, {pipeline_mode = #tpu.pipeline_mode<synchronous>, transform_indices = @transform_1, window_bounds = array<i64: 64, 32>}, {pipeline_mode = #tpu.pipeline_mode<synchronous>, transform_indices = @transform_2, window_bounds = array<i64: 1, 32>}, {transform_indices = @transform_3, window_bounds = array<i64: 8, 32>}, {transform_indices = @transform_4, window_bounds = array<i64: 8, 32>}]} {
    %c0 = arith.constant 0 : index
    %c0_0 = arith.constant 0 : index
    %0 = vector.load %arg1[%c0, %c0_0] : memref<8x64xf32, #tpu.memory_space<vmem>>, vector<8x64xf32>
    %c0_1 = arith.constant 0 : index
    %c0_2 = arith.constant 0 : index
    %1 = vector.load %arg2[%c0_1, %c0_2] : memref<64x32xf32, #tpu.memory_space<vmem>>, vector<64x32xf32>
    %cst = arith.constant dense<0.000000e+00> : vector<8x32xf32>
    %2 = tpu.matmul %0, %1, %cst {dimension_numbers = #tpu.dot_dimension_numbers<[1], [0], [0], [1], [0, 0, 1, 1], [], []>} : vector<8x64xf32>, vector<64x32xf32>, vector<8x32xf32> -> vector<8x32xf32>
    %c0_3 = arith.constant 0 : index
    %c0_4 = arith.constant 0 : index
    %3 = vector.load %arg3[%c0_3, %c0_4] : memref<1x32xf32, #tpu.memory_space<vmem>>, vector<1x32xf32>
    %4 = vector.broadcast %3 : vector<1x32xf32> to vector<8x32xf32>
    %5 = arith.addf %2, %4 : vector<8x32xf32>
    %c0_5 = arith.constant 0 : index
    %c0_6 = arith.constant 0 : index
    %6 = vector.load %arg4[%c0_5, %c0_6] : memref<8x32xf32, #tpu.memory_space<vmem>>, vector<8x32xf32>
    tpu.vector_store %arg4[%c0_5, %c0_6], %5 {strides = array<i32>} : memref<8x32xf32, #tpu.memory_space<vmem>>, vector<8x32xf32>,
    %7 = arith.mulf %5, %5 : vector<8x32xf32>
    %cst_7 = arith.constant dense<0.000000e+00> : vector<8xf32>
    %8 = vector.multi_reduction <add>, %7, %cst_7 [1] : vector<8x32xf32> to vector<8xf32>
    %9 = vector.shape_cast %8 : vector<8xf32> to vector<8x1xf32>
    %10 = math.rsqrt %9 : vector<8x1xf32>
    %11 = vector.broadcast %10 : vector<8x1xf32> to vector<8x32xf32>
    %12 = arith.mulf %5, %11 : vector<8x32xf32>
    %c0_8 = arith.constant 0 : index
    %c0_9 = arith.constant 0 : index
    %13 = vector.load %arg5[%c0_8, %c0_9] : memref<8x32xf32, #tpu.memory_space<vmem>>, vector<8x32xf32>
    tpu.vector_store %arg5[%c0_8, %c0_9], %12 {strides = array<i32>} : memref<8x32xf32, #tpu.memory_space<vmem>>, vector<8x32xf32>,
    return
  }
  func.func @transform_0(%arg0: i32) -> (i32, i32) {
    %c0_i32 = arith.constant 0 : i32
    %c0_i32_0 = arith.constant 0 : i32
    return %arg0, %c0_i32 : i32, i32
  }
  func.func @transform_1(%arg0: i32) -> (i32, i32) {
    %c0_i32 = arith.constant 0 : i32
    %c0_i32_0 = arith.constant 0 : i32
    %c0_i32_1 = arith.constant 0 : i32
    return %c0_i32, %c0_i32_0 : i32, i32
  }
  func.func @transform_2(%arg0: i32) -> (i32, i32) {
    %c0_i32 = arith.constant 0 : i32
    %c0_i32_0 = arith.constant 0 : i32
    %c0_i32_1 = arith.constant 0 : i32
    return %c0_i32, %c0_i32_0 : i32, i32
  }
  func.func @transform_3(%arg0: i32) -> (i32, i32) {
    %c0_i32 = arith.constant 0 : i32
    %c0_i32_0 = arith.constant 0 : i32
    return %arg0, %c0_i32 : i32, i32
  }
  func.func @transform_4(%arg0: i32) -> (i32, i32) {
    %c0_i32 = arith.constant 0 : i32
    %c0_i32_0 = arith.constant 0 : i32
    return %arg0, %c0_i32 : i32, i32
  }
}

</mosaic_0001>

<llo_original>
// kernel: tpu_custom_call.1
$region0: #{tpu_custom_call.1}
  #allocation0 [shape = 'u32[]', space=smem, size = 0x4, offset = 0x4, fixed_abs, tag = 'smem constant byte address 0x4 - core index']
  #allocation1 [shape = 'u32[144,128]{1,0:T(1,128)}', space=vmem, size = 0x12000, scoped, tag = 'internal scratch']
  %s0 = inlined_call_operand.vmem [shape: f32[8,64], index: 0, kind: input, shape index: {}]
  %s1 = inlined_call_operand.vmem [shape: f32[64,32], index: 1, kind: input, shape index: {}]
  %s2 = inlined_call_operand.vmem [shape: f32[1,32], index: 2, kind: input, shape index: {}]
  %s3 = inlined_call_operand.hbm [shape: f32[8,32], index: 3, kind: output, shape index: {0}]
  %s4 = inlined_call_operand.hbm [shape: f32[8,32], index: 4, kind: output, shape index: {1}]
  %5 = xla_tuple %s3, %s4
  %s6 = sld [smem:[#allocation0]]
  $region30: #{tpu_custom_call.1} parent=0
    _
  %s8 = ssub.s32 1, %s6
  %s9 = scalar_select 0, %s8, %s6
  $region1: #{tpu_custom_call.1} parent=0
    #allocation2 [shape = 'u8[4096]{0}', space=vmem, size = 0x1000, scoped, tag = 'output window, operand 0, single buffered']
    #allocation3 [shape = 's32[1]{0}', space=sflag, size = 0x4, scoped, tag = 'scoped memory for tpu_custom_call.1']
    #allocation4 [shape = 'u8[4096]{0}', space=vmem, size = 0x1000, scoped, tag = 'output window, operand 1, single buffered']
    #allocation5 [shape = 's32[1]{0}', space=sflag, size = 0x4, scoped, tag = 'scoped memory for tpu_custom_call.1']
    %10 = vsyncpa [#allocation3], 0
    %11 = vsyncpa [#allocation5], 0
    // Predicated region
    $region2: #{tpu_custom_call.1} parent=1 // pred_check
      _
    $region3: #{tpu_custom_call.1} parent=1 // pred_check_branch
      %13 = sbr.rel (0) target = $region5
    $region4: #{tpu_custom_call.1} parent=1 // pred_region
      _
    $region5: #{tpu_custom_call.1} parent=1 // pred_fallthru
      _
    // Predicated region
    $region6: #{tpu_custom_call.1} parent=1 // pred_check
      _
    $region7: #{tpu_custom_call.1} parent=1 // pred_check_branch
      %15 = sbr.rel (0) target = $region9
    $region8: #{tpu_custom_call.1} parent=1 // pred_region
      _
    $region9: #{tpu_custom_call.1} parent=1 // pred_fallthru
      _
    // Predicated region
    $region10: #{tpu_custom_call.1} parent=1 // pred_check
      _
    $region11: #{tpu_custom_call.1} parent=1 // pred_check_branch
      %17 = sbr.rel (0) target = $region13
    $region12: #{tpu_custom_call.1} parent=1 // pred_region
      _
    $region13: #{tpu_custom_call.1} parent=1 // pred_fallthru
      _
    %v18 = vld [vmem:[%s0] sm:$0xff]
    %v19 = vld [vmem:[%s1] sm:$0xff]
    %v20 = vld [vmem:[%s1 + $0x8] sm:$0xff]
    %v21 = vld [vmem:[%s1 + $0x10] sm:$0xff]
    %v22 = vld [vmem:[%s1 + $0x18] sm:$0xff]
    %v23 = vld [vmem:[%s1 + $0x20] sm:$0xff]
    %v24 = vld [vmem:[%s1 + $0x28] sm:$0xff]
    %v25 = vld [vmem:[%s1 + $0x30] sm:$0xff]
    %v26 = vld [vmem:[%s1 + $0x38] sm:$0xff]
    %v27 = vld [vmem:[%s2] sm:$0x1]
    %v29 = vlaneseq
    %v30 = vshrl.u32 %v29, 7
    %v31 = vsub.s32 0, %v30
    %v32 = vrot.slane %v27, %v31
    %vm34 = vcmask 523264
    %v36 = vsel %vm34, %v18, 0
    %38 = vmatprep.subr.mxu0 0.0
    %39 = vmatpush1.msra.mxu0 0.0
    %40 = vmatprep.subr.mxu0 0.0
    %41 = vmatpush1.msra.mxu0 0.0
    %42 = vmatprep.subr.mxu0 0.0
    %43 = vmatpush1.msra.mxu0 0.0
    %44 = vmatprep.subr.mxu0 0.0
    %45 = vmatpush1.msra.mxu0 0.0
    %46 = vmatprep.subr.mxu0 0.0
    %47 = vmatpush1.msra.mxu0 0.0
    %48 = vmatprep.subr.mxu0 0.0
    %49 = vmatpush1.msra.mxu0 0.0
    %50 = vmatprep.subr.mxu0 0.0
    %51 = vmatpush1.msra.mxu0 0.0
    %52 = vmatprep.subr.mxu0 0.0
    %53 = vmatpush1.msra.mxu0 0.0
    %54 = vmatprep.subr.mxu0 0.0
    %55 = vmatpush1.msra.mxu0 %v26
    %56 = vmatprep.subr.mxu0 0.0
    %57 = vmatpush1.msra.mxu0 %v25
    %58 = vmatprep.subr.mxu0 0.0
    %59 = vmatpush1.msra.mxu0 %v24
    %60 = vmatprep.subr.mxu0 0.0
    %61 = vmatpush1.msra.mxu0 %v23
    %62 = vmatprep.subr.mxu0 0.0
    %63 = vmatpush1.msra.mxu0 %v22
    %64 = vmatprep.subr.mxu0 0.0
    %65 = vmatpush1.msra.mxu0 %v21
    %66 = vmatprep.subr.mxu0 0.0
    %67 = vmatpush1.msra.mxu0 %v20
    %68 = vmatprep.subr.mxu0 0.0
    %69 = vmatpush1.msra.mxu0 %v19
    %70 = vmatprep.subr.mxu0 0.0
    %71 = vmatpush2.msra.mxu0 0.0
    %72 = vmatprep.subr.mxu0 0.0
    %73 = vmatpush2.msra.mxu0 0.0
    %74 = vmatprep.subr.mxu0 0.0
    %75 = vmatpush2.msra.mxu0 0.0
    %76 = vmatprep.subr.mxu0 0.0
    %77 = vmatpush2.msra.mxu0 0.0
    %78 = vmatprep.subr.mxu0 0.0
    %79 = vmatpush2.msra.mxu0 0.0
    %80 = vmatprep.subr.mxu0 0.0
    %81 = vmatpush2.msra.mxu0 0.0
    %82 = vmatprep.subr.mxu0 0.0
    %83 = vmatpush2.msra.mxu0 0.0
    %84 = vmatprep.subr.mxu0 0.0
    %85 = vmatpush2.msra.mxu0 0.0
    %86 = vmatprep.subr.mxu0 0.0
    %87 = vmatpush2.msra.mxu0 0.0
    %88 = vmatprep.subr.mxu0 0.0
    %89 = vmatpush2.msra.mxu0 0.0
    %90 = vmatprep.subr.mxu0 0.0
    %91 = vmatpush2.msra.mxu0 0.0
    %92 = vmatprep.subr.mxu0 0.0
    %93 = vmatpush2.msra.mxu0 0.0
    %94 = vmatprep.subr.mxu0 0.0
    %95 = vmatpush2.msra.mxu0 0.0
    %96 = vmatprep.subr.mxu0 0.0
    %97 = vmatpush2.msra.mxu0 0.0
    %98 = vmatprep.subr.mxu0 0.0
    %99 = vmatpush2.msra.mxu0 0.0
    %100 = vmatprep.subr.mxu0 0.0
    %101 = vmatpush2.msra.mxu0 0.0
    %102 = vmatprep.mubr.f32.mxu0 0.0
    %103 = vmatmul.mubr.f32.gmra.mxu0 %v36
    %v104 = vpop.f32.mrf.mxu0
    %v105 = vadd.f32 %v32, %v104
    %v106 = vpop.f32.mrf.mxu0
    %107 = vdwg.mxu0
    %vm108 = vcmask 261120
    %109 = vst.msk [vmem:[#allocation2] sm:$0xff] %vm108, %v105
    %v110 = vmul.f32 %v105, %v105
    %v111 = vsel %vm108, %v110, 0.0
    %112 = vadd.xlane.f32.xlu0 %v111
    %v113 = vpop.xlane.xlu0 %112
    %v114 = vrsqrt.pop %v113
    %v115 = vmul.f32 %v105, %v114
    %116 = vst.msk [vmem:[#allocation4] sm:$0xff] %vm108, %v115
    // Predicated region
    $region14: #{tpu_custom_call.1} parent=1 // pred_check
      _
    $region15: #{tpu_custom_call.1} parent=1 // pred_check_branch
      %118 = sbr.rel (0) target = $region17
    $region16: #{tpu_custom_call.1} parent=1 // pred_region
      %s120 = ssub.s32 128, 128
      %121 = vsyncadd [#allocation3], %s120
      %s123 = sshll.u32 [#allocation2], 4
      %s124 = int_to_ptr.vmem [resolvable:$true] %s123
      %126 = dma.vmem_to_hbm [thread:$0]  %s124, 128, %s3, [#allocation3]
    $region17: #{tpu_custom_call.1} parent=1 // pred_fallthru
      _
    // Predicated region
    $region18: #{tpu_custom_call.1} parent=1 // pred_check
      _
    $region19: #{tpu_custom_call.1} parent=1 // pred_check_branch
      %128 = sbr.rel (0) target = $region21
    $region20: #{tpu_custom_call.1} parent=1 // pred_region
      %s130 = ssub.s32 128, 128
      %131 = vsyncadd [#allocation5], %s130
      %s133 = sshll.u32 [#allocation4], 4
      %s134 = int_to_ptr.vmem [resolvable:$true] %s133
      %136 = dma.vmem_to_hbm [thread:$0]  %s134, 128, %s4, [#allocation5]
    $region21: #{tpu_custom_call.1} parent=1 // pred_fallthru
      _
    // Predicated region
    $region22: #{tpu_custom_call.1} parent=1 // pred_check
      _
    $region23: #{tpu_custom_call.1} parent=1 // pred_check_branch
      %138 = sbr.rel (0) target = $region25
    $region24: #{tpu_custom_call.1} parent=1 // pred_region
      %139 = dma.done [#allocation3], 128
    $region25: #{tpu_custom_call.1} parent=1 // pred_fallthru
      _
    // Predicated region
    $region26: #{tpu_custom_call.1} parent=1 // pred_check
      _
    $region27: #{tpu_custom_call.1} parent=1 // pred_check_branch
      %141 = sbr.rel (0) target = $region29
    $region28: #{tpu_custom_call.1} parent=1 // pred_region
      %142 = dma.done [#allocation5], 128
    $region29: #{tpu_custom_call.1} parent=1 // pred_fallthru
      _
    %143 = vsyncpa [#allocation3], 1
    %144 = vsyncpa [#allocation5], 1

</llo_original>
